<compile_context>
chip_gen: v6e
topology: v6e:2x2x1
jax: 0.10.0
libtpu: 0.0.40
codegen_flags: <defaults>
</compile_context>

<pallas_src>
import functools

import jax
import jax.numpy as jnp
from jax.experimental import pallas as pl
from jax.experimental.pallas import tpu as pltpu

NEG_BIG = -1e30  # finite "minus infinity" for masking


def mha_kernel(x_ref, wqkv_ref, wp_ref, bp_ref, mask_ref, o_ref, *,
               num_heads, head_size, scale):
    """Fused MHA for the whole (folded) batch.

    x_ref    : (R, C)    bf16  rows = B*T (batches folded onto sublanes)
    wqkv_ref : (C, 3*HD) bf16  fused Q/K/V projection weights
    wp_ref   : (HD, C)   bf16  output projection weight
    bp_ref   : (1, C)    f32   output projection bias
    mask_ref : (R, R)    f32   additive mask: 0 where attendable, -1e30 otherwise
                               (block-diagonal over batches AND causal within a batch)
    o_ref    : (R, C)    f32
    """
    HD = num_heads * head_size

    x = x_ref[...]                                                    # (R, C) bf16

    # One fused QKV matmul on the MXU (bf16 operands, f32 accumulation).
    qkv = jnp.dot(x, wqkv_ref[...], preferred_element_type=jnp.float32)  # (R, 3HD)
    qkv_b = qkv.astype(jnp.bfloat16)

    mask = mask_ref[...]                                              # (R, R) f32

    head_outs = []
    for h in range(num_heads):            # static unroll; num_heads is small
        lo = h * head_size
        hi = lo + head_size
        qh = qkv_b[:, lo:hi]                                          # (R, hs)
        kh = qkv_b[:, HD + lo:HD + hi]                                # (R, hs)
        vh = qkv_b[:, 2 * HD + lo:2 * HD + hi]                        # (R, hs)

        # 2-D dots keep the lane axis dense; no (H, T, T) intermediate.
        s = jnp.dot(qh, kh.T, preferred_element_type=jnp.float32) * scale + mask
        m = jnp.max(s, axis=-1, keepdims=True)
        e = jnp.exp(s - m)
        denom = jnp.sum(e, axis=-1, keepdims=True)
        wei = e * pl.reciprocal(denom, approx=True)                   # EUP recip
        head_outs.append(
            jnp.dot(wei.astype(jnp.bfloat16), vh,
                    preferred_element_type=jnp.float32))              # (R, hs) f32

    head_cat = jnp.concatenate(head_outs, axis=-1)                    # (R, HD) f32

    out = jnp.dot(head_cat.astype(jnp.bfloat16), wp_ref[...],
                  preferred_element_type=jnp.float32) + bp_ref[...]
    o_ref[...] = out.astype(o_ref.dtype)


def multi_head_attention(x, wq, wk, wv, wp, bp, *, num_heads, head_size):
    B, T, C = x.shape
    HD = num_heads * head_size
    scale = float(head_size) ** -0.5
    R = B * T

    # Fold the batch: (B, T, C) -> (B*T, C); bf16 for the MXU.
    x2 = x.reshape(R, C).astype(jnp.bfloat16)
    wqkv = jnp.concatenate([wq, wk, wv], axis=1).astype(jnp.bfloat16)  # (C, 3HD)
    wp_b = wp.astype(jnp.bfloat16)
    bp2 = bp.reshape(1, C).astype(jnp.float32)

    # Additive mask built once outside the kernel: causal within each batch,
    # blocked (-1e30) across batches, so the folded (R x R) attention is exactly
    # per-batch causal attention.
    rows = jnp.arange(R)
    bi = rows // T
    ti = rows % T
    allowed = (bi[:, None] == bi[None, :]) & (ti[:, None] >= ti[None, :])
    mask = jnp.where(allowed, 0.0, NEG_BIG).astype(jnp.float32)

    flops = (2 * R * C * 3 * HD                      # fused QKV projection
             + num_heads * 4 * R * R * head_size     # q @ k^T and wei @ v per head
             + 2 * R * HD * C)                       # output projection
    transcendentals = num_heads * (R * R + R)        # exp + reciprocal
    bytes_accessed = (x2.size * 2 + wqkv.size * 2 + wp_b.size * 2
                      + bp2.size * 4 + mask.size * 4 + R * C * 4)

    kernel = functools.partial(mha_kernel, num_heads=num_heads,
                               head_size=head_size, scale=scale)

    out2 = pl.pallas_call(
        kernel,
        out_shape=jax.ShapeDtypeStruct((R, C), jnp.float32),
        grid_spec=pltpu.PrefetchScalarGridSpec(
            num_scalar_prefetch=0,
            grid=(1,),                               # whole batch in one step
            in_specs=[
                pl.BlockSpec((R, C), lambda i: (0, 0)),        # x (all batches)
                pl.BlockSpec((C, 3 * HD), lambda i: (0, 0)),   # fused Wqkv
                pl.BlockSpec((HD, C), lambda i: (0, 0)),       # Wproj
                pl.BlockSpec((1, C), lambda i: (0, 0)),        # bproj
                pl.BlockSpec((R, R), lambda i: (0, 0)),        # additive mask
            ],
            out_specs=pl.BlockSpec((R, C), lambda i: (0, 0)),
        ),
        compiler_params=pltpu.CompilerParams(
            dimension_semantics=("parallel",)),
        cost_estimate=pl.CostEstimate(flops=flops,
                                      transcendentals=transcendentals,
                                      bytes_accessed=bytes_accessed),
    )(x2, wqkv, wp_b, bp2, mask)

    return out2.reshape(B, T, C).astype(x.dtype)


def _reference(x, wq, wk, wv, wp, bp, *, num_heads, head_size):
    """Pure-JAX f32 reference mirroring the PyTorch forward (dropout = identity)."""
    B, T, C = x.shape
    outs = []
    for h in range(num_heads):
        sl = slice(h * head_size, (h + 1) * head_size)
        q = x @ wq[:, sl]
        k = x @ wk[:, sl]
        v = x @ wv[:, sl]
        wei = (q @ jnp.swapaxes(k, -1, -2)) * (head_size ** -0.5)
        causal = jnp.tril(jnp.ones((T, T), dtype=bool))
        wei = jnp.where(causal, wei, -jnp.inf)
        wei = jax.nn.softmax(wei, axis=-1)
        outs.append(wei @ v)
    cat = jnp.concatenate(outs, axis=-1)
    return cat @ wp + bp


if __name__ == "__main__":
    # Small shapes consistent with the module: block_size (T) = 8, n_embed = 32.
    B, T, C = 2, 8, 32
    num_heads, head_size = 4, 8
    HD = num_heads * head_size

    key = jax.random.PRNGKey(0)
    kx, kq, kk, kv, kp, kb = jax.random.split(key, 6)

    x = jax.random.normal(kx, (B, T, C), dtype=jnp.float32)
    # Linear weights stored as (in, out) so forward is x @ W (PyTorch stores W^T).
    wq = jax.random.normal(kq, (C, HD), dtype=jnp.float32) * 0.1
    wk = jax.random.normal(kk, (C, HD), dtype=jnp.float32) * 0.1
    wv = jax.random.normal(kv, (C, HD), dtype=jnp.float32) * 0.1
    wp = jax.random.normal(kp, (HD, C), dtype=jnp.float32) * 0.1
    bp = jax.random.normal(kb, (C,), dtype=jnp.float32) * 0.1

    out = multi_head_attention(x, wq, wk, wv, wp, bp,
                               num_heads=num_heads, head_size=head_size)
    out = jax.block_until_ready(out)

    ref = _reference(x, wq, wk, wv, wp, bp,
                     num_heads=num_heads, head_size=head_size)
    # bf16 MXU operands + approx reciprocal -> relaxed (but still tight) tolerance.
    assert jnp.allclose(out, ref, atol=2e-2, rtol=2e-2), \
        f"max err {jnp.max(jnp.abs(out - ref))}"

    print("KERNEL_OK")
</pallas_src>

<mosaic_0001>
module attributes {stable_mosaic.version = 11 : i64} {
  func.func @mha_kernel(%arg0: i32, %arg1: memref<16x32xbf16, #tpu.memory_space<vmem>>, %arg2: memref<32x96xbf16, #tpu.memory_space<vmem>>, %arg3: memref<32x32xbf16, #tpu.memory_space<vmem>>, %arg4: memref<1x32xf32, #tpu.memory_space<vmem>>, %arg5: memref<16x16xf32, #tpu.memory_space<vmem>>, %arg6: memref<16x32xf32, #tpu.memory_space<vmem>>) attributes {dimension_semantics = [#tpu.dimension_semantics<parallel>], iteration_bounds = array<i64: 1>, scalar_prefetch = 0 : i64, scratch_operands = 0 : i64, tpu.core_type = #tpu.core_type<tc>, window_params = [{pipeline_mode = #tpu.pipeline_mode<synchronous>, transform_indices = @transform_0, window_bounds = array<i64: 16, 32>}, {pipeline_mode = #tpu.pipeline_mode<synchronous>, transform_indices = @transform_1, window_bounds = array<i64: 32, 96>}, {pipeline_mode = #tpu.pipeline_mode<synchronous>, transform_indices = @transform_2, window_bounds = array<i64: 32, 32>}, {pipeline_mode = #tpu.pipeline_mode<synchronous>, transform_indices = @transform_3, window_bounds = array<i64: 1, 32>}, {pipeline_mode = #tpu.pipeline_mode<synchronous>, transform_indices = @transform_4, window_bounds = array<i64: 16, 16>}, {pipeline_mode = #tpu.pipeline_mode<synchronous>, transform_indices = @transform_5, window_bounds = array<i64: 16, 32>}]} {
    %c0 = arith.constant 0 : index
    %c0_0 = arith.constant 0 : index
    %0 = vector.load %arg1[%c0, %c0_0] : memref<16x32xbf16, #tpu.memory_space<vmem>>, vector<16x32xbf16>
    %c0_1 = arith.constant 0 : index
    %c0_2 = arith.constant 0 : index
    %1 = vector.load %arg2[%c0_1, %c0_2] : memref<32x96xbf16, #tpu.memory_space<vmem>>, vector<32x96xbf16>
    %cst = arith.constant dense<0.000000e+00> : vector<16x96xf32>
    %2 = tpu.matmul %0, %1, %cst {dimension_numbers = #tpu.dot_dimension_numbers<[1], [0], [0], [1], [0, 0, 1, 1], [], []>} : vector<16x32xbf16>, vector<32x96xbf16>, vector<16x96xf32> -> vector<16x96xf32>
    %3 = arith.truncf %2 : vector<16x96xf32> to vector<16x96xbf16>
    %c0_3 = arith.constant 0 : index
    %c0_4 = arith.constant 0 : index
    %4 = vector.load %arg5[%c0_3, %c0_4] : memref<16x16xf32, #tpu.memory_space<vmem>>, vector<16x16xf32>
    %5 = vector.extract_strided_slice %3 {offsets = [0, 0], sizes = [16, 8], strides = [1, 1]} : vector<16x96xbf16> to vector<16x8xbf16>
    %6 = vector.extract_strided_slice %3 {offsets = [0, 32], sizes = [16, 8], strides = [1, 1]} : vector<16x96xbf16> to vector<16x8xbf16>
    %7 = vector.extract_strided_slice %3 {offsets = [0, 64], sizes = [16, 8], strides = [1, 1]} : vector<16x96xbf16> to vector<16x8xbf16>
    %8 = tpu.transpose %6, [1, 0] : vector<16x8xbf16> -> vector<8x16xbf16>
    %cst_5 = arith.constant dense<0.000000e+00> : vector<16x16xf32>
    %9 = tpu.matmul %5, %8, %cst_5 {dimension_numbers = #tpu.dot_dimension_numbers<[1], [0], [0], [1], [0, 0, 1, 1], [], []>} : vector<16x8xbf16>, vector<8x16xbf16>, vector<16x16xf32> -> vector<16x16xf32>
    %cst_6 = arith.constant 0.353553385 : f32
    %10 = vector.broadcast %cst_6 : f32 to vector<16x16xf32>
    %11 = arith.mulf %9, %10 : vector<16x16xf32>
    %12 = arith.addf %11, %4 : vector<16x16xf32>
    %cst_7 = arith.constant dense<0xFF800000> : vector<16xf32>
    %13 = vector.multi_reduction <maximumf>, %12, %cst_7 [1] : vector<16x16xf32> to vector<16xf32>
    %14 = vector.shape_cast %13 : vector<16xf32> to vector<16x1xf32>
    %15 = vector.broadcast %14 : vector<16x1xf32> to vector<16x16xf32>
    %16 = arith.subf %12, %15 : vector<16x16xf32>
    %17 = math.exp %16 : vector<16x16xf32>
    %cst_8 = arith.constant dense<0.000000e+00> : vector<16xf32>
    %18 = vector.multi_reduction <add>, %17, %cst_8 [1] : vector<16x16xf32> to vector<16xf32>
    %19 = vector.shape_cast %18 : vector<16xf32> to vector<16x1xf32>
    %20 = tpu.reciprocal %19 {approx = true} : vector<16x1xf32> -> vector<16x1xf32>
    %21 = vector.broadcast %20 : vector<16x1xf32> to vector<16x16xf32>
    %22 = arith.mulf %17, %21 : vector<16x16xf32>
    %23 = arith.truncf %22 : vector<16x16xf32> to vector<16x16xbf16>
    %cst_9 = arith.constant dense<0.000000e+00> : vector<16x8xf32>
    %24 = tpu.matmul %23, %7, %cst_9 {dimension_numbers = #tpu.dot_dimension_numbers<[1], [0], [0], [1], [0, 0, 1, 1], [], []>} : vector<16x16xbf16>, vector<16x8xbf16>, vector<16x8xf32> -> vector<16x8xf32>
    %25 = vector.extract_strided_slice %3 {offsets = [0, 8], sizes = [16, 8], strides = [1, 1]} : vector<16x96xbf16> to vector<16x8xbf16>
    %26 = vector.extract_strided_slice %3 {offsets = [0, 40], sizes = [16, 8], strides = [1, 1]} : vector<16x96xbf16> to vector<16x8xbf16>
    %27 = vector.extract_strided_slice %3 {offsets = [0, 72], sizes = [16, 8], strides = [1, 1]} : vector<16x96xbf16> to vector<16x8xbf16>
    %28 = tpu.transpose %26, [1, 0] : vector<16x8xbf16> -> vector<8x16xbf16>
    %cst_10 = arith.constant dense<0.000000e+00> : vector<16x16xf32>
    %29 = tpu.matmul %25, %28, %cst_10 {dimension_numbers = #tpu.dot_dimension_numbers<[1], [0], [0], [1], [0, 0, 1, 1], [], []>} : vector<16x8xbf16>, vector<8x16xbf16>, vector<16x16xf32> -> vector<16x16xf32>
    %cst_11 = arith.constant 0.353553385 : f32
    %30 = vector.broadcast %cst_11 : f32 to vector<16x16xf32>
    %31 = arith.mulf %29, %30 : vector<16x16xf32>
    %32 = arith.addf %31, %4 : vector<16x16xf32>
    %cst_12 = arith.constant dense<0xFF800000> : vector<16xf32>
    %33 = vector.multi_reduction <maximumf>, %32, %cst_12 [1] : vector<16x16xf32> to vector<16xf32>
    %34 = vector.shape_cast %33 : vector<16xf32> to vector<16x1xf32>
    %35 = vector.broadcast %34 : vector<16x1xf32> to vector<16x16xf32>
    %36 = arith.subf %32, %35 : vector<16x16xf32>
    %37 = math.exp %36 : vector<16x16xf32>
    %cst_13 = arith.constant dense<0.000000e+00> : vector<16xf32>
    %38 = vector.multi_reduction <add>, %37, %cst_13 [1] : vector<16x16xf32> to vector<16xf32>
    %39 = vector.shape_cast %38 : vector<16xf32> to vector<16x1xf32>
    %40 = tpu.reciprocal %39 {approx = true} : vector<16x1xf32> -> vector<16x1xf32>
    %41 = vector.broadcast %40 : vector<16x1xf32> to vector<16x16xf32>
    %42 = arith.mulf %37, %41 : vector<16x16xf32>
    %43 = arith.truncf %42 : vector<16x16xf32> to vector<16x16xbf16>
    %cst_14 = arith.constant dense<0.000000e+00> : vector<16x8xf32>
    %44 = tpu.matmul %43, %27, %cst_14 {dimension_numbers = #tpu.dot_dimension_numbers<[1], [0], [0], [1], [0, 0, 1, 1], [], []>} : vector<16x16xbf16>, vector<16x8xbf16>, vector<16x8xf32> -> vector<16x8xf32>
    %45 = vector.extract_strided_slice %3 {offsets = [0, 16], sizes = [16, 8], strides = [1, 1]} : vector<16x96xbf16> to vector<16x8xbf16>
    %46 = vector.extract_strided_slice %3 {offsets = [0, 48], sizes = [16, 8], strides = [1, 1]} : vector<16x96xbf16> to vector<16x8xbf16>
    %47 = vector.extract_strided_slice %3 {offsets = [0, 80], sizes = [16, 8], strides = [1, 1]} : vector<16x96xbf16> to vector<16x8xbf16>
    %48 = tpu.transpose %46, [1, 0] : vector<16x8xbf16> -> vector<8x16xbf16>
    %cst_15 = arith.constant dense<0.000000e+00> : vector<16x16xf32>
    %49 = tpu.matmul %45, %48, %cst_15 {dimension_numbers = #tpu.dot_dimension_numbers<[1], [0], [0], [1], [0, 0, 1, 1], [], []>} : vector<16x8xbf16>, vector<8x16xbf16>, vector<16x16xf32> -> vector<16x16xf32>
    %cst_16 = arith.constant 0.353553385 : f32
    %50 = vector.broadcast %cst_16 : f32 to vector<16x16xf32>
    %51 = arith.mulf %49, %50 : vector<16x16xf32>
    %52 = arith.addf %51, %4 : vector<16x16xf32>
    %cst_17 = arith.constant dense<0xFF800000> : vector<16xf32>
    %53 = vector.multi_reduction <maximumf>, %52, %cst_17 [1] : vector<16x16xf32> to vector<16xf32>
    %54 = vector.shape_cast %53 : vector<16xf32> to vector<16x1xf32>
    %55 = vector.broadcast %54 : vector<16x1xf32> to vector<16x16xf32>
    %56 = arith.subf %52, %55 : vector<16x16xf32>
    %57 = math.exp %56 : vector<16x16xf32>
    %cst_18 = arith.constant dense<0.000000e+00> : vector<16xf32>
    %58 = vector.multi_reduction <add>, %57, %cst_18 [1] : vector<16x16xf32> to vector<16xf32>
    %59 = vector.shape_cast %58 : vector<16xf32> to vector<16x1xf32>
    %60 = tpu.reciprocal %59 {approx = true} : vector<16x1xf32> -> vector<16x1xf32>
    %61 = vector.broadcast %60 : vector<16x1xf32> to vector<16x16xf32>
    %62 = arith.mulf %57, %61 : vector<16x16xf32>
    %63 = arith.truncf %62 : vector<16x16xf32> to vector<16x16xbf16>
    %cst_19 = arith.constant dense<0.000000e+00> : vector<16x8xf32>
    %64 = tpu.matmul %63, %47, %cst_19 {dimension_numbers = #tpu.dot_dimension_numbers<[1], [0], [0], [1], [0, 0, 1, 1], [], []>} : vector<16x16xbf16>, vector<16x8xbf16>, vector<16x8xf32> -> vector<16x8xf32>
    %65 = vector.extract_strided_slice %3 {offsets = [0, 24], sizes = [16, 8], strides = [1, 1]} : vector<16x96xbf16> to vector<16x8xbf16>
    %66 = vector.extract_strided_slice %3 {offsets = [0, 56], sizes = [16, 8], strides = [1, 1]} : vector<16x96xbf16> to vector<16x8xbf16>
    %67 = vector.extract_strided_slice %3 {offsets = [0, 88], sizes = [16, 8], strides = [1, 1]} : vector<16x96xbf16> to vector<16x8xbf16>
    %68 = tpu.transpose %66, [1, 0] : vector<16x8xbf16> -> vector<8x16xbf16>
    %cst_20 = arith.constant dense<0.000000e+00> : vector<16x16xf32>
    %69 = tpu.matmul %65, %68, %cst_20 {dimension_numbers = #tpu.dot_dimension_numbers<[1], [0], [0], [1], [0, 0, 1, 1], [], []>} : vector<16x8xbf16>, vector<8x16xbf16>, vector<16x16xf32> -> vector<16x16xf32>
    %cst_21 = arith.constant 0.353553385 : f32
    %70 = vector.broadcast %cst_21 : f32 to vector<16x16xf32>
    %71 = arith.mulf %69, %70 : vector<16x16xf32>
    %72 = arith.addf %71, %4 : vector<16x16xf32>
    %cst_22 = arith.constant dense<0xFF800000> : vector<16xf32>
    %73 = vector.multi_reduction <maximumf>, %72, %cst_22 [1] : vector<16x16xf32> to vector<16xf32>
    %74 = vector.shape_cast %73 : vector<16xf32> to vector<16x1xf32>
    %75 = vector.broadcast %74 : vector<16x1xf32> to vector<16x16xf32>
    %76 = arith.subf %72, %75 : vector<16x16xf32>
    %77 = math.exp %76 : vector<16x16xf32>
    %cst_23 = arith.constant dense<0.000000e+00> : vector<16xf32>
    %78 = vector.multi_reduction <add>, %77, %cst_23 [1] : vector<16x16xf32> to vector<16xf32>
    %79 = vector.shape_cast %78 : vector<16xf32> to vector<16x1xf32>
    %80 = tpu.reciprocal %79 {approx = true} : vector<16x1xf32> -> vector<16x1xf32>
    %81 = vector.broadcast %80 : vector<16x1xf32> to vector<16x16xf32>
    %82 = arith.mulf %77, %81 : vector<16x16xf32>
    %83 = arith.truncf %82 : vector<16x16xf32> to vector<16x16xbf16>
    %cst_24 = arith.constant dense<0.000000e+00> : vector<16x8xf32>
    %84 = tpu.matmul %83, %67, %cst_24 {dimension_numbers = #tpu.dot_dimension_numbers<[1], [0], [0], [1], [0, 0, 1, 1], [], []>} : vector<16x16xbf16>, vector<16x8xbf16>, vector<16x8xf32> -> vector<16x8xf32>
    %85 = tpu.concatenate %24, %44, %64, %84 in 1 : vector<16x8xf32>, vector<16x8xf32>, vector<16x8xf32>, vector<16x8xf32> -> vector<16x32xf32>
    %86 = arith.truncf %85 : vector<16x32xf32> to vector<16x32xbf16>
    %c0_25 = arith.constant 0 : index
    %c0_26 = arith.constant 0 : index
    %87 = vector.load %arg3[%c0_25, %c0_26] : memref<32x32xbf16, #tpu.memory_space<vmem>>, vector<32x32xbf16>
    %cst_27 = arith.constant dense<0.000000e+00> : vector<16x32xf32>
    %88 = tpu.matmul %86, %87, %cst_27 {dimension_numbers = #tpu.dot_dimension_numbers<[1], [0], [0], [1], [0, 0, 1, 1], [], []>} : vector<16x32xbf16>, vector<32x32xbf16>, vector<16x32xf32> -> vector<16x32xf32>
    %c0_28 = arith.constant 0 : index
    %c0_29 = arith.constant 0 : index
    %89 = vector.load %arg4[%c0_28, %c0_29] : memref<1x32xf32, #tpu.memory_space<vmem>>, vector<1x32xf32>
    %90 = vector.broadcast %89 : vector<1x32xf32> to vector<16x32xf32>
    %91 = arith.addf %88, %90 : vector<16x32xf32>
    %c0_30 = arith.constant 0 : index
    %c0_31 = arith.constant 0 : index
    %92 = vector.load %arg6[%c0_30, %c0_31] : memref<16x32xf32, #tpu.memory_space<vmem>>, vector<16x32xf32>
    tpu.vector_store %arg6[%c0_30, %c0_31], %91 {strides = array<i32>} : memref<16x32xf32, #tpu.memory_space<vmem>>, vector<16x32xf32>,
    return
  }
  func.func @transform_0(%arg0: i32) -> (i32, i32) {
    %c0_i32 = arith.constant 0 : i32
    %c0_i32_0 = arith.constant 0 : i32
    %c0_i32_1 = arith.constant 0 : i32
    return %c0_i32, %c0_i32_0 : i32, i32
  }
  func.func @transform_1(%arg0: i32) -> (i32, i32) {
    %c0_i32 = arith.constant 0 : i32
    %c0_i32_0 = arith.constant 0 : i32
    %c0_i32_1 = arith.constant 0 : i32
    return %c0_i32, %c0_i32_0 : i32, i32
  }
  func.func @transform_2(%arg0: i32) -> (i32, i32) {
    %c0_i32 = arith.constant 0 : i32
    %c0_i32_0 = arith.constant 0 : i32
    %c0_i32_1 = arith.constant 0 : i32
    return %c0_i32, %c0_i32_0 : i32, i32
  }
  func.func @transform_3(%arg0: i32) -> (i32, i32) {
    %c0_i32 = arith.constant 0 : i32
    %c0_i32_0 = arith.constant 0 : i32
    %c0_i32_1 = arith.constant 0 : i32
    return %c0_i32, %c0_i32_0 : i32, i32
  }
  func.func @transform_4(%arg0: i32) -> (i32, i32) {
    %c0_i32 = arith.constant 0 : i32
    %c0_i32_0 = arith.constant 0 : i32
    %c0_i32_1 = arith.constant 0 : i32
    return %c0_i32, %c0_i32_0 : i32, i32
  }
  func.func @transform_5(%arg0: i32) -> (i32, i32) {
    %c0_i32 = arith.constant 0 : i32
    %c0_i32_0 = arith.constant 0 : i32
    %c0_i32_1 = arith.constant 0 : i32
    return %c0_i32, %c0_i32_0 : i32, i32
  }
}

</mosaic_0001>

<llo_original>
// kernel: tpu_custom_call.1
$region0: #{tpu_custom_call.1}
  #allocation0 [shape = 'u32[]', space=smem, size = 0x4, offset = 0x4, fixed_abs, tag = 'smem constant byte address 0x4 - core index']
  #allocation1 [shape = 'u32[144,128]{1,0:T(1,128)}', space=vmem, size = 0x12000, scoped, tag = 'internal scratch']
  %s0 = inlined_call_operand.hbm [shape: bf16[16,32], index: 0, kind: input, shape index: {}]
  %s1 = inlined_call_operand.hbm [shape: bf16[32,96], index: 1, kind: input, shape index: {}]
  %s2 = inlined_call_operand.hbm [shape: bf16[32,32], index: 2, kind: input, shape index: {}]
  %s3 = inlined_call_operand.vmem [shape: f32[1,32], index: 3, kind: input, shape index: {}]
  %s4 = inlined_call_operand.hbm [shape: f32[16,16], index: 4, kind: input, shape index: {}]
  %s5 = inlined_call_operand.hbm [shape: f32[16,32], index: 5, kind: output, shape index: {}]
  %s6 = sld [smem:[#allocation0]]
  $region46: #{tpu_custom_call.1} parent=0
    _
  %s8 = ssub.s32 1, %s6
  %s9 = scalar_select 0, %s8, %s6
  $region1: #{tpu_custom_call.1} parent=0
    #allocation2 [shape = 'u8[4096]{0}', space=vmem, size = 0x1000, scoped, tag = 'input window, operand 0, single buffered']
    #allocation3 [shape = 's32[1]{0}', space=sflag, size = 0x4, scoped, tag = 'scoped memory for tpu_custom_call.1']
    #allocation4 [shape = 's32[1]{0}', space=sflag, size = 0x4, scoped, tag = 'scoped memory for tpu_custom_call.1']
    #allocation5 [shape = 'u8[8192]{0}', space=vmem, size = 0x2000, scoped, tag = 'input window, operand 1, single buffered']
    #allocation6 [shape = 's32[1]{0}', space=sflag, size = 0x4, scoped, tag = 'scoped memory for tpu_custom_call.1']
    #allocation7 [shape = 'u8[8192]{0}', space=vmem, size = 0x2000, scoped, tag = 'input window, operand 2, single buffered']
    #allocation8 [shape = 'u8[8192]{0}', space=vmem, size = 0x2000, scoped, tag = 'input window, operand 4, single buffered']
    #allocation9 [shape = 's32[1]{0}', space=sflag, size = 0x4, scoped, tag = 'scoped memory for tpu_custom_call.1']
    #allocation10 [shape = 'u8[8192]{0}', space=vmem, size = 0x2000, scoped, tag = 'output window, operand 0, single buffered']
    %10 = vsyncpa [#allocation3], 0
    %11 = vsyncpa [#allocation6], 0
    %12 = vsyncpa [#allocation9], 0
    %13 = vsyncpa [#allocation4], 0
    // Predicated region
    $region2: #{tpu_custom_call.1} parent=1 // pred_check
      _
    $region3: #{tpu_custom_call.1} parent=1 // pred_check_branch
      %15 = sbr.rel (0) target = $region5
    $region4: #{tpu_custom_call.1} parent=1 // pred_region
      %s17 = ssub.s32 128, 128
      %18 = vsyncadd [#allocation3], %s17
      %s19 = sshll.u32 [#allocation2], 4
      %s20 = int_to_ptr.vmem [resolvable:$true] %s19
      %25 = dma.hbm_to_vmem [thread:$0]  %s0, 128, %s20, [#allocation3], 64, 64, 4
    $region5: #{tpu_custom_call.1} parent=1 // pred_fallthru
      _
    // Predicated region
    $region6: #{tpu_custom_call.1} parent=1 // pred_check
      _
    $region7: #{tpu_custom_call.1} parent=1 // pred_check_branch
      %27 = sbr.rel (0) target = $region9
    $region8: #{tpu_custom_call.1} parent=1 // pred_region
      %s29 = ssub.s32 256, 256
      %30 = vsyncadd [#allocation6], %s29
      %s31 = sshll.u32 [#allocation5], 4
      %s32 = int_to_ptr.vmem [resolvable:$true] %s31
      %37 = dma.hbm_to_vmem [thread:$0]  %s1, 256, %s32, [#allocation6], 64, 64, 4
    $region9: #{tpu_custom_call.1} parent=1 // pred_fallthru
      _
    // Predicated region
    $region10: #{tpu_custom_call.1} parent=1 // pred_check
      _
    $region11: #{tpu_custom_call.1} parent=1 // pred_check_branch
      %39 = sbr.rel (0) target = $region13
    $region12: #{tpu_custom_call.1} parent=1 // pred_region
      %s41 = ssub.s32 256, 256
      %42 = vsyncadd [#allocation6], %s41
      %s43 = sshll.u32 [#allocation7], 4
      %s44 = int_to_ptr.vmem [resolvable:$true] %s43
      %49 = dma.hbm_to_vmem [thread:$0]  %s2, 256, %s44, [#allocation6], 64, 64, 4
    $region13: #{tpu_custom_call.1} parent=1 // pred_fallthru
      _
    // Predicated region
    $region14: #{tpu_custom_call.1} parent=1 // pred_check
      _
    $region15: #{tpu_custom_call.1} parent=1 // pred_check_branch
      %51 = sbr.rel (0) target = $region17
    $region16: #{tpu_custom_call.1} parent=1 // pred_region
      _
    $region17: #{tpu_custom_call.1} parent=1 // pred_fallthru
      _
    // Predicated region
    $region18: #{tpu_custom_call.1} parent=1 // pred_check
      _
    $region19: #{tpu_custom_call.1} parent=1 // pred_check_branch
      %53 = sbr.rel (0) target = $region21
    $region20: #{tpu_custom_call.1} parent=1 // pred_region
      %s55 = ssub.s32 256, 256
      %56 = vsyncadd [#allocation9], %s55
      %s57 = sshll.u32 [#allocation8], 4
      %s58 = int_to_ptr.vmem [resolvable:$true] %s57
      %63 = dma.hbm_to_vmem [thread:$0]  %s4, 256, %s58, [#allocation9], 128, 128, 8
    $region21: #{tpu_custom_call.1} parent=1 // pred_fallthru
      _
    // Predicated region
    $region22: #{tpu_custom_call.1} parent=1 // pred_check
      _
    $region23: #{tpu_custom_call.1} parent=1 // pred_check_branch
      %65 = sbr.rel (0) target = $region25
    $region24: #{tpu_custom_call.1} parent=1 // pred_region
      %66 = dma.done [#allocation3], 128
    $region25: #{tpu_custom_call.1} parent=1 // pred_fallthru
      _
    // Predicated region
    $region26: #{tpu_custom_call.1} parent=1 // pred_check
      _
    $region27: #{tpu_custom_call.1} parent=1 // pred_check_branch
      %68 = sbr.rel (0) target = $region29
    $region28: #{tpu_custom_call.1} parent=1 // pred_region
      %69 = dma.done [#allocation6], 256
    $region29: #{tpu_custom_call.1} parent=1 // pred_fallthru
      _
    // Predicated region
    $region30: #{tpu_custom_call.1} parent=1 // pred_check
      _
    $region31: #{tpu_custom_call.1} parent=1 // pred_check_branch
      %71 = sbr.rel (0) target = $region33
    $region32: #{tpu_custom_call.1} parent=1 // pred_region
      %72 = dma.done [#allocation6], 256
    $region33: #{tpu_custom_call.1} parent=1 // pred_fallthru
      _
    // Predicated region
    $region34: #{tpu_custom_call.1} parent=1 // pred_check
      _
    $region35: #{tpu_custom_call.1} parent=1 // pred_check_branch
      %74 = sbr.rel (0) target = $region37
    $region36: #{tpu_custom_call.1} parent=1 // pred_region
      %75 = dma.done [#allocation9], 256
    $region37: #{tpu_custom_call.1} parent=1 // pred_fallthru
      _
    %v77 = vld [vmem:[#allocation2] sm:$0xf]
    %v78 = vld [vmem:[#allocation2 + $0x4] sm:$0xf]
    %v79 = vld [vmem:[#allocation5] sm:$0xf]
    %v80 = vld [vmem:[#allocation5 + $0x4] sm:$0xf]
    %v81 = vld [vmem:[#allocation5 + $0x8] sm:$0xf]
    %v82 = vld [vmem:[#allocation5 + $0xc] sm:$0xf]
    %v85 = vunpack.c.l.b16 %v77
    %v86 = vunpack.c.l.b16 %v78
    %v87 = vpack.c.b16 %v86, %v85
    %v92 = vunpack.c.l.b16 %v79
    %v93 = vunpack.c.l.b16 %v80
    %v94 = vunpack.c.l.b16 %v81
    %v95 = vunpack.c.l.b16 %v82
    %v96 = vpack.c.b16 %v93, %v92
    %v97 = vpack.c.b16 %v95, %v94
    %vm100 = vcmask 261120
    %v102 = vsel %vm100, %v87, 0
    %104 = vmatprep.subr.bf16.mxu0 0
    %105 = vmatpush1.bf16.msra.mxu0 0
    %106 = vmatprep.subr.bf16.mxu0 0
    %107 = vmatpush1.bf16.msra.mxu0 0
    %108 = vmatprep.subr.bf16.mxu0 0
    %109 = vmatpush1.bf16.msra.mxu0 0
    %110 = vmatprep.subr.bf16.mxu0 0
    %111 = vmatpush1.bf16.msra.mxu0 0
    %112 = vmatprep.subr.bf16.mxu0 0
    %113 = vmatpush1.bf16.msra.mxu0 0
    %114 = vmatprep.subr.bf16.mxu0 0
    %115 = vmatpush1.bf16.msra.mxu0 0
    %116 = vmatprep.subr.bf16.mxu0 0
    %117 = vmatpush1.bf16.msra.mxu0 %v97
    %118 = vmatprep.subr.bf16.mxu0 0
    %119 = vmatpush1.bf16.msra.mxu0 %v96
    %120 = vmatprep.subr.bf16.mxu0 0
    %121 = vmatpush2.bf16.msra.mxu0 0
    %122 = vmatprep.subr.bf16.mxu0 0
    %123 = vmatpush2.bf16.msra.mxu0 0
    %124 = vmatprep.subr.bf16.mxu0 0
    %125 = vmatpush2.bf16.msra.mxu0 0
    %126 = vmatprep.subr.bf16.mxu0 0
    %127 = vmatpush2.bf16.msra.mxu0 0
    %128 = vmatprep.subr.bf16.mxu0 0
    %129 = vmatpush2.bf16.msra.mxu0 0
    %130 = vmatprep.subr.bf16.mxu0 0
    %131 = vmatpush2.bf16.msra.mxu0 0
    %132 = vmatprep.subr.bf16.mxu0 0
    %133 = vmatpush2.bf16.msra.mxu0 0
    %134 = vmatprep.subr.bf16.mxu0 0
    %135 = vmatpush2.bf16.msra.mxu0 0
    %136 = vmatprep.mubr.bf16.mxu0 0
    %137 = vmatmul.mubr.bf16.gmra.mxu0 %v102
    %v138 = vpop.f32.mrf.mxu0
    %v139 = vadd.f32 0.0, %v138
    %v140 = vpop.f32.mrf.mxu0
    %v141 = vpop.f32.mrf.mxu0
    %v142 = vadd.f32 0.0, %v141
    %v143 = vpop.f32.mrf.mxu0
    %144 = vdwg.mxu0
    %v145 = vpack.c.bf16 %v142, %v139
    %v146 = vld [vmem:[#allocation8] sm:$0xff]
    %v147 = vld [vmem:[#allocation8 + $0x8] sm:$0xff]
    %149 = vrot.lane.b32.xlu0 %v145, 96
    %v150 = vpop.permute.xlu0 %149
    %vm151 = vcmask 64512
    %v153 = vsel %vm151, %v145, 0
    %v156 = vsel %vm151, %v150, 0
    %158 = vmatprep.subr.bf16.mxu0 0
    %159 = vmatpush1.bf16.xpose.msra.mxu0 0
    %160 = vmatprep.subr.bf16.mxu0 0
    %161 = vmatpush1.bf16.xpose.msra.mxu0 0
    %162 = vmatprep.subr.bf16.mxu0 0
    %163 = vmatpush1.bf16.xpose.msra.mxu0 0
    %164 = vmatprep.subr.bf16.mxu0 0
    %165 = vmatpush1.bf16.xpose.msra.mxu0 0
    %166 = vmatprep.subr.bf16.mxu0 0
    %167 = vmatpush1.bf16.xpose.msra.mxu0 0
    %168 = vmatprep.subr.bf16.mxu0 0
    %169 = vmatpush1.bf16.xpose.msra.mxu0 0
    %170 = vmatprep.subr.bf16.mxu0 0
    %171 = vmatpush1.bf16.xpose.msra.mxu0 0
    %172 = vmatprep.subr.bf16.mxu0 0
    %173 = vmatpush1.bf16.xpose.msra.mxu0 %v156
    %174 = vmatprep.subr.bf16.mxu0 0
    %175 = vmatpush2.bf16.xpose.msra.mxu0 0
    %176 = vmatprep.subr.bf16.mxu0 0
    %177 = vmatpush2.bf16.xpose.msra.mxu0 0
    %178 = vmatprep.subr.bf16.mxu0 0
    %179 = vmatpush2.bf16.xpose.msra.mxu0 0
    %180 = vmatprep.subr.bf16.mxu0 0
    %181 = vmatpush2.bf16.xpose.msra.mxu0 0
    %182 = vmatprep.subr.bf16.mxu0 0
    %183 = vmatpush2.bf16.xpose.msra.mxu0 0
    %184 = vmatprep.subr.bf16.mxu0 0
    %185 = vmatpush2.bf16.xpose.msra.mxu0 0
    %186 = vmatprep.subr.bf16.mxu0 0
    %187 = vmatpush2.bf16.xpose.msra.mxu0 0
    %188 = vmatprep.subr.bf16.mxu0 0
    %189 = vmatpush2.bf16.xpose.msra.mxu0 0
    %190 = vmatprep.mubr.bf16.mxu0 0
    %191 = vmatmul.mubr.bf16.gmra.mxu0 %v153
    %v192 = vpop.f32.mrf.mxu0
    %v193 = vadd.f32 0.0, %v192
    %v194 = vpop.f32.mrf.mxu0
    %v195 = vpop.f32.mrf.mxu0
    %v196 = vadd.f32 0.0, %v195
    %v197 = vpop.f32.mrf.mxu0
    %198 = vdwg.mxu0
    %v199 = vmul.f32 %v193, 0.35355338
    %v200 = vmul.f32 %v196, 0.35355338
    %v201 = vadd.f32 %v199, %v146
    %v202 = vadd.f32 %v200, %v147
    %vm203 = vcmask 130048
    %v204 = vsel %vm203, %v201, -inf
    %205 = vmax.xlane.f32.xlu0 %v204
    %v206 = vpop.xlane.xlu0 %205
    %v207 = vsel %vm203, %v202, -inf
    %208 = vmax.xlane.f32.xlu0 %v207
    %v209 = vpop.xlane.xlu0 %208
    %v210 = vsub.f32 %v201, %v206
    %v211 = vsub.f32 %v202, %v209
    %v212 = vmul.f32 %v210, 1.442695
    %v213 = vpow.pop %v212
    %v214 = vmul.f32 %v211, 1.442695
    %v215 = vpow.pop %v214
    %v216 = vsel %vm203, %v213, 0.0
    %217 = vadd.xlane.f32.xlu0 %v216
    %v218 = vpop.xlane.xlu0 %217
    %v219 = vsel %vm203, %v215, 0.0
    %220 = vadd.xlane.f32.xlu0 %v219
    %v221 = vpop.xlane.xlu0 %220
    %v222 = vrcp.pop %v218
    %v223 = vrcp.pop %v221
    %v224 = vmul.f32 %v213, %v222
    %v225 = vmul.f32 %v215, %v223
    %v226 = vpack.c.bf16 %v225, %v224
    %227 = vrot.lane.b32.xlu0 %v145, 64
    %v228 = vpop.permute.xlu0 %227
    %v231 = vsel %vm203, %v226, 0
    %233 = vmatprep.subr.bf16.mxu0 0
    %234 = vmatpush1.bf16.msra.mxu0 0
    %235 = vmatprep.subr.bf16.mxu0 0
    %236 = vmatpush1.bf16.msra.mxu0 0
    %237 = vmatprep.subr.bf16.mxu0 0
    %238 = vmatpush1.bf16.msra.mxu0 0
    %239 = vmatprep.subr.bf16.mxu0 0
    %240 = vmatpush1.bf16.msra.mxu0 0
    %241 = vmatprep.subr.bf16.mxu0 0
    %242 = vmatpush1.bf16.msra.mxu0 0
    %243 = vmatprep.subr.bf16.mxu0 0
    %244 = vmatpush1.bf16.msra.mxu0 0
    %245 = vmatprep.subr.bf16.mxu0 0
    %246 = vmatpush1.bf16.msra.mxu0 0
    %247 = vmatprep.subr.bf16.mxu0 0
    %248 = vmatpush1.bf16.msra.mxu0 %v228
    %249 = vmatprep.subr.bf16.mxu0 0
    %250 = vmatpush2.bf16.msra.mxu0 0
    %251 = vmatprep.subr.bf16.mxu0 0
    %252 = vmatpush2.bf16.msra.mxu0 0
    %253 = vmatprep.subr.bf16.mxu0 0
    %254 = vmatpush2.bf16.msra.mxu0 0
    %255 = vmatprep.subr.bf16.mxu0 0
    %256 = vmatpush2.bf16.msra.mxu0 0
    %257 = vmatprep.subr.bf16.mxu0 0
    %258 = vmatpush2.bf16.msra.mxu0 0
    %259 = vmatprep.subr.bf16.mxu0 0
    %260 = vmatpush2.bf16.msra.mxu0 0
    %261 = vmatprep.subr.bf16.mxu0 0
    %262 = vmatpush2.bf16.msra.mxu0 0
    %263 = vmatprep.subr.bf16.mxu0 0
    %264 = vmatpush2.bf16.msra.mxu0 0
    %265 = vmatprep.mubr.bf16.mxu0 0
    %266 = vmatmul.mubr.bf16.gmra.mxu0 %v231
    %v267 = vpop.f32.mrf.mxu0
    %v268 = vadd.f32 0.0, %v267
    %v269 = vpop.f32.mrf.mxu0
    %v270 = vpop.f32.mrf.mxu0
    %v271 = vadd.f32 0.0, %v270
    %v272 = vpop.f32.mrf.mxu0
    %273 = vdwg.mxu0
    %274 = vrot.lane.b32.xlu0 %v145, 120
    %v275 = vpop.permute.xlu0 %274
    %276 = vrot.lane.b32.xlu0 %v145, 88
    %v277 = vpop.permute.xlu0 %276
    %v279 = vsel %vm151, %v275, 0
    %v282 = vsel %vm151, %v277, 0
    %284 = vmatprep.subr.bf16.mxu0 0
    %285 = vmatpush1.bf16.xpose.msra.mxu0 0
    %286 = vmatprep.subr.bf16.mxu0 0
    %287 = vmatpush1.bf16.xpose.msra.mxu0 0
    %288 = vmatprep.subr.bf16.mxu0 0
    %289 = vmatpush1.bf16.xpose.msra.mxu0 0
    %290 = vmatprep.subr.bf16.mxu0 0
    %291 = vmatpush1.bf16.xpose.msra.mxu0 0
    %292 = vmatprep.subr.bf16.mxu0 0
    %293 = vmatpush1.bf16.xpose.msra.mxu0 0
    %294 = vmatprep.subr.bf16.mxu0 0
    %295 = vmatpush1.bf16.xpose.msra.mxu0 0
    %296 = vmatprep.subr.bf16.mxu0 0
    %297 = vmatpush1.bf16.xpose.msra.mxu0 0
    %298 = vmatprep.subr.bf16.mxu0 0
    %299 = vmatpush1.bf16.xpose.msra.mxu0 %v282
    %300 = vmatprep.subr.bf16.mxu0 0
    %301 = vmatpush2.bf16.xpose.msra.mxu0 0
    %302 = vmatprep.subr.bf16.mxu0 0
    %303 = vmatpush2.bf16.xpose.msra.mxu0 0
    %304 = vmatprep.subr.bf16.mxu0 0
    %305 = vmatpush2.bf16.xpose.msra.mxu0 0
    %306 = vmatprep.subr.bf16.mxu0 0
    %307 = vmatpush2.bf16.xpose.msra.mxu0 0
    %308 = vmatprep.subr.bf16.mxu0 0
    %309 = vmatpush2.bf16.xpose.msra.mxu0 0
    %310 = vmatprep.subr.bf16.mxu0 0
    %311 = vmatpush2.bf16.xpose.msra.mxu0 0
    %312 = vmatprep.subr.bf16.mxu0 0
    %313 = vmatpush2.bf16.xpose.msra.mxu0 0
    %314 = vmatprep.subr.bf16.mxu0 0
    %315 = vmatpush2.bf16.xpose.msra.mxu0 0
    %316 = vmatprep.mubr.bf16.mxu0 0
    %317 = vmatmul.mubr.bf16.gmra.mxu0 %v279
    %v318 = vpop.f32.mrf.mxu0
    %v319 = vadd.f32 0.0, %v318
    %v320 = vpop.f32.mrf.mxu0
    %v321 = vpop.f32.mrf.mxu0
    %v322 = vadd.f32 0.0, %v321
    %v323 = vpop.f32.mrf.mxu0
    %324 = vdwg.mxu0
    %v325 = vmul.f32 %v319, 0.35355338
    %v326 = vmul.f32 %v322, 0.35355338
    %v327 = vadd.f32 %v325, %v146
    %v328 = vadd.f32 %v326, %v147
    %v329 = vsel %vm203, %v327, -inf
    %330 = vmax.xlane.f32.xlu0 %v329
    %v331 = vpop.xlane.xlu0 %330
    %v332 = vsel %vm203, %v328, -inf
    %333 = vmax.xlane.f32.xlu0 %v332
    %v334 = vpop.xlane.xlu0 %333
    %v335 = vsub.f32 %v327, %v331
    %v336 = vsub.f32 %v328, %v334
    %v337 = vmul.f32 %v335, 1.442695
    %v338 = vpow.pop %v337
    %v339 = vmul.f32 %v336, 1.442695
    %v340 = vpow.pop %v339
    %v341 = vsel %vm203, %v338, 0.0
    %342 = vadd.xlane.f32.xlu0 %v341
    %v343 = vpop.xlane.xlu0 %342
    %v344 = vsel %vm203, %v340, 0.0
    %345 = vadd.xlane.f32.xlu0 %v344
    %v346 = vpop.xlane.xlu0 %345
    %v347 = vrcp.pop %v343
    %v348 = vrcp.pop %v346
    %v349 = vmul.f32 %v338, %v347
    %v350 = vmul.f32 %v340, %v348
    %v351 = vpack.c.bf16 %v350, %v349
    %352 = vrot.lane.b32.xlu0 %v145, 56
    %v353 = vpop.permute.xlu0 %352
    %v356 = vsel %vm203, %v351, 0
    %358 = vmatprep.subr.bf16.mxu0 0
    %359 = vmatpush1.bf16.msra.mxu0 0
    %360 = vmatprep.subr.bf16.mxu0 0
    %361 = vmatpush1.bf16.msra.mxu0 0
    %362 = vmatprep.subr.bf16.mxu0 0
    %363 = vmatpush1.bf16.msra.mxu0 0
    %364 = vmatprep.subr.bf16.mxu0 0
    %365 = vmatpush1.bf16.msra.mxu0 0
    %366 = vmatprep.subr.bf16.mxu0 0
    %367 = vmatpush1.bf16.msra.mxu0 0
    %368 = vmatprep.subr.bf16.mxu0 0
    %369 = vmatpush1.bf16.msra.mxu0 0
    %370 = vmatprep.subr.bf16.mxu0 0
    %371 = vmatpush1.bf16.msra.mxu0 0
    %372 = vmatprep.subr.bf16.mxu0 0
    %373 = vmatpush1.bf16.msra.mxu0 %v353
    %374 = vmatprep.subr.bf16.mxu0 0
    %375 = vmatpush2.bf16.msra.mxu0 0
    %376 = vmatprep.subr.bf16.mxu0 0
    %377 = vmatpush2.bf16.msra.mxu0 0
    %378 = vmatprep.subr.bf16.mxu0 0
    %379 = vmatpush2.bf16.msra.mxu0 0
    %380 = vmatprep.subr.bf16.mxu0 0
    %381 = vmatpush2.bf16.msra.mxu0 0
    %382 = vmatprep.subr.bf16.mxu0 0
    %383 = vmatpush2.bf16.msra.mxu0 0
    %384 = vmatprep.subr.bf16.mxu0 0
    %385 = vmatpush2.bf16.msra.mxu0 0
    %386 = vmatprep.subr.bf16.mxu0 0
    %387 = vmatpush2.bf16.msra.mxu0 0
    %388 = vmatprep.subr.bf16.mxu0 0
    %389 = vmatpush2.bf16.msra.mxu0 0
    %390 = vmatprep.mubr.bf16.mxu0 0
    %391 = vmatmul.mubr.bf16.gmra.mxu0 %v356
    %v392 = vpop.f32.mrf.mxu0
    %v393 = vadd.f32 0.0, %v392
    %v394 = vpop.f32.mrf.mxu0
    %v395 = vpop.f32.mrf.mxu0
    %v396 = vadd.f32 0.0, %v395
    %v397 = vpop.f32.mrf.mxu0
    %398 = vdwg.mxu0
    %399 = vrot.lane.b32.xlu0 %v145, 112
    %v400 = vpop.permute.xlu0 %399
    %401 = vrot.lane.b32.xlu0 %v145, 80
    %v402 = vpop.permute.xlu0 %401
    %v404 = vsel %vm151, %v400, 0
    %v407 = vsel %vm151, %v402, 0
    %409 = vmatprep.subr.bf16.mxu0 0
    %410 = vmatpush1.bf16.xpose.msra.mxu0 0
    %411 = vmatprep.subr.bf16.mxu0 0
    %412 = vmatpush1.bf16.xpose.msra.mxu0 0
    %413 = vmatprep.subr.bf16.mxu0 0
    %414 = vmatpush1.bf16.xpose.msra.mxu0 0
    %415 = vmatprep.subr.bf16.mxu0 0
    %416 = vmatpush1.bf16.xpose.msra.mxu0 0
    %417 = vmatprep.subr.bf16.mxu0 0
    %418 = vmatpush1.bf16.xpose.msra.mxu0 0
    %419 = vmatprep.subr.bf16.mxu0 0
    %420 = vmatpush1.bf16.xpose.msra.mxu0 0
    %421 = vmatprep.subr.bf16.mxu0 0
    %422 = vmatpush1.bf16.xpose.msra.mxu0 0
    %423 = vmatprep.subr.bf16.mxu0 0
    %424 = vmatpush1.bf16.xpose.msra.mxu0 %v407
    %425 = vmatprep.subr.bf16.mxu0 0
    %426 = vmatpush2.bf16.xpose.msra.mxu0 0
    %427 = vmatprep.subr.bf16.mxu0 0
    %428 = vmatpush2.bf16.xpose.msra.mxu0 0
    %429 = vmatprep.subr.bf16.mxu0 0
    %430 = vmatpush2.bf16.xpose.msra.mxu0 0
    %431 = vmatprep.subr.bf16.mxu0 0
    %432 = vmatpush2.bf16.xpose.msra.mxu0 0
    %433 = vmatprep.subr.bf16.mxu0 0
    %434 = vmatpush2.bf16.xpose.msra.mxu0 0
    %435 = vmatprep.subr.bf16.mxu0 0
    %436 = vmatpush2.bf16.xpose.msra.mxu0 0
    %437 = vmatprep.subr.bf16.mxu0 0
    %438 = vmatpush2.bf16.xpose.msra.mxu0 0
    %439 = vmatprep.subr.bf16.mxu0 0
    %440 = vmatpush2.bf16.xpose.msra.mxu0 0
    %441 = vmatprep.mubr.bf16.mxu0 0
    %442 = vmatmul.mubr.bf16.gmra.mxu0 %v404
    %v443 = vpop.f32.mrf.mxu0
    %v444 = vadd.f32 0.0, %v443
    %v445 = vpop.f32.mrf.mxu0
    %v446 = vpop.f32.mrf.mxu0
    %v447 = vadd.f32 0.0, %v446
    %v448 = vpop.f32.mrf.mxu0
    %449 = vdwg.mxu0
    %v450 = vmul.f32 %v444, 0.35355338
    %v451 = vmul.f32 %v447, 0.35355338
    %v452 = vadd.f32 %v450, %v146
    %v453 = vadd.f32 %v451, %v147
    %v454 = vsel %vm203, %v452, -inf
    %455 = vmax.xlane.f32.xlu0 %v454
    %v456 = vpop.xlane.xlu0 %455
    %v457 = vsel %vm203, %v453, -inf
    %458 = vmax.xlane.f32.xlu0 %v457
    %v459 = vpop.xlane.xlu0 %458
    %v460 = vsub.f32 %v452, %v456
    %v461 = vsub.f32 %v453, %v459
    %v462 = vmul.f32 %v460, 1.442695
    %v463 = vpow.pop %v462
    %v464 = vmul.f32 %v461, 1.442695
    %v465 = vpow.pop %v464
    %v466 = vsel %vm203, %v463, 0.0
    %467 = vadd.xlane.f32.xlu0 %v466
    %v468 = vpop.xlane.xlu0 %467
    %v469 = vsel %vm203, %v465, 0.0
    %470 = vadd.xlane.f32.xlu0 %v469
    %v471 = vpop.xlane.xlu0 %470
    %v472 = vrcp.pop %v468
    %v473 = vrcp.pop %v471
    %v474 = vmul.f32 %v463, %v472
    %v475 = vmul.f32 %v465, %v473
    %v476 = vpack.c.bf16 %v475, %v474
    %477 = vrot.lane.b32.xlu0 %v145, 48
    %v478 = vpop.permute.xlu0 %477
    %v481 = vsel %vm203, %v476, 0
    %483 = vmatprep.subr.bf16.mxu0 0
    %484 = vmatpush1.bf16.msra.mxu0 0
    %485 = vmatprep.subr.bf16.mxu0 0
    %486 = vmatpush1.bf16.msra.mxu0 0
    %487 = vmatprep.subr.bf16.mxu0 0
    %488 = vmatpush1.bf16.msra.mxu0 0
    %489 = vmatprep.subr.bf16.mxu0 0
    %490 = vmatpush1.bf16.msra.mxu0 0
    %491 = vmatprep.subr.bf16.mxu0 0
    %492 = vmatpush1.bf16.msra.mxu0 0
    %493 = vmatprep.subr.bf16.mxu0 0
    %494 = vmatpush1.bf16.msra.mxu0 0
    %495 = vmatprep.subr.bf16.mxu0 0
    %496 = vmatpush1.bf16.msra.mxu0 0
    %497 = vmatprep.subr.bf16.mxu0 0
    %498 = vmatpush1.bf16.msra.mxu0 %v478
    %499 = vmatprep.subr.bf16.mxu0 0
    %500 = vmatpush2.bf16.msra.mxu0 0
    %501 = vmatprep.subr.bf16.mxu0 0
    %502 = vmatpush2.bf16.msra.mxu0 0
    %503 = vmatprep.subr.bf16.mxu0 0
    %504 = vmatpush2.bf16.msra.mxu0 0
    %505 = vmatprep.subr.bf16.mxu0 0
    %506 = vmatpush2.bf16.msra.mxu0 0
    %507 = vmatprep.subr.bf16.mxu0 0
    %508 = vmatpush2.bf16.msra.mxu0 0
    %509 = vmatprep.subr.bf16.mxu0 0
    %510 = vmatpush2.bf16.msra.mxu0 0
    %511 = vmatprep.subr.bf16.mxu0 0
    %512 = vmatpush2.bf16.msra.mxu0 0
    %513 = vmatprep.subr.bf16.mxu0 0
    %514 = vmatpush2.bf16.msra.mxu0 0
    %515 = vmatprep.mubr.bf16.mxu0 0
    %516 = vmatmul.mubr.bf16.gmra.mxu0 %v481
    %v517 = vpop.f32.mrf.mxu0
    %v518 = vadd.f32 0.0, %v517
    %v519 = vpop.f32.mrf.mxu0
    %v520 = vpop.f32.mrf.mxu0
    %v521 = vadd.f32 0.0, %v520
    %v522 = vpop.f32.mrf.mxu0
    %523 = vdwg.mxu0
    %524 = vrot.lane.b32.xlu0 %v145, 104
    %v525 = vpop.permute.xlu0 %524
    %526 = vrot.lane.b32.xlu0 %v145, 72
    %v527 = vpop.permute.xlu0 %526
    %v529 = vsel %vm151, %v525, 0
    %v532 = vsel %vm151, %v527, 0
    %534 = vmatprep.subr.bf16.mxu0 0
    %535 = vmatpush1.bf16.xpose.msra.mxu0 0
    %536 = vmatprep.subr.bf16.mxu0 0
    %537 = vmatpush1.bf16.xpose.msra.mxu0 0
    %538 = vmatprep.subr.bf16.mxu0 0
    %539 = vmatpush1.bf16.xpose.msra.mxu0 0
    %540 = vmatprep.subr.bf16.mxu0 0
    %541 = vmatpush1.bf16.xpose.msra.mxu0 0
    %542 = vmatprep.subr.bf16.mxu0 0
    %543 = vmatpush1.bf16.xpose.msra.mxu0 0
    %544 = vmatprep.subr.bf16.mxu0 0
    %545 = vmatpush1.bf16.xpose.msra.mxu0 0
    %546 = vmatprep.subr.bf16.mxu0 0
    %547 = vmatpush1.bf16.xpose.msra.mxu0 0
    %548 = vmatprep.subr.bf16.mxu0 0
    %549 = vmatpush1.bf16.xpose.msra.mxu0 %v532
    %550 = vmatprep.subr.bf16.mxu0 0
    %551 = vmatpush2.bf16.xpose.msra.mxu0 0
    %552 = vmatprep.subr.bf16.mxu0 0
    %553 = vmatpush2.bf16.xpose.msra.mxu0 0
    %554 = vmatprep.subr.bf16.mxu0 0
    %555 = vmatpush2.bf16.xpose.msra.mxu0 0
    %556 = vmatprep.subr.bf16.mxu0 0
    %557 = vmatpush2.bf16.xpose.msra.mxu0 0
    %558 = vmatprep.subr.bf16.mxu0 0
    %559 = vmatpush2.bf16.xpose.msra.mxu0 0
    %560 = vmatprep.subr.bf16.mxu0 0
    %561 = vmatpush2.bf16.xpose.msra.mxu0 0
    %562 = vmatprep.subr.bf16.mxu0 0
    %563 = vmatpush2.bf16.xpose.msra.mxu0 0
    %564 = vmatprep.subr.bf16.mxu0 0
    %565 = vmatpush2.bf16.xpose.msra.mxu0 0
    %566 = vmatprep.mubr.bf16.mxu0 0
    %567 = vmatmul.mubr.bf16.gmra.mxu0 %v529
    %v568 = vpop.f32.mrf.mxu0
    %v569 = vadd.f32 0.0, %v568
    %v570 = vpop.f32.mrf.mxu0
    %v571 = vpop.f32.mrf.mxu0
    %v572 = vadd.f32 0.0, %v571
    %v573 = vpop.f32.mrf.mxu0
    %574 = vdwg.mxu0
    %v575 = vmul.f32 %v569, 0.35355338
    %v576 = vmul.f32 %v572, 0.35355338
    %v577 = vadd.f32 %v575, %v146
    %v578 = vadd.f32 %v576, %v147
    %v579 = vsel %vm203, %v577, -inf
    %580 = vmax.xlane.f32.xlu0 %v579
    %v581 = vpop.xlane.xlu0 %580
    %v582 = vsel %vm203, %v578, -inf
    %583 = vmax.xlane.f32.xlu0 %v582
    %v584 = vpop.xlane.xlu0 %583
    %v585 = vsub.f32 %v577, %v581
    %v586 = vsub.f32 %v578, %v584
    %v587 = vmul.f32 %v585, 1.442695
    %v588 = vpow.pop %v587
    %v589 = vmul.f32 %v586, 1.442695
    %v590 = vpow.pop %v589
    %v591 = vsel %vm203, %v588, 0.0
    %592 = vadd.xlane.f32.xlu0 %v591
    %v593 = vpop.xlane.xlu0 %592
    %v594 = vsel %vm203, %v590, 0.0
    %595 = vadd.xlane.f32.xlu0 %v594
    %v596 = vpop.xlane.xlu0 %595
    %v597 = vrcp.pop %v593
    %v598 = vrcp.pop %v596
    %v599 = vmul.f32 %v588, %v597
    %v600 = vmul.f32 %v590, %v598
    %v601 = vpack.c.bf16 %v600, %v599
    %602 = vrot.lane.b32.xlu0 %v145, 40
    %v603 = vpop.permute.xlu0 %602
    %v606 = vsel %vm203, %v601, 0
    %608 = vmatprep.subr.bf16.mxu0 0
    %609 = vmatpush1.bf16.msra.mxu0 0
    %610 = vmatprep.subr.bf16.mxu0 0
    %611 = vmatpush1.bf16.msra.mxu0 0
    %612 = vmatprep.subr.bf16.mxu0 0
    %613 = vmatpush1.bf16.msra.mxu0 0
    %614 = vmatprep.subr.bf16.mxu0 0
    %615 = vmatpush1.bf16.msra.mxu0 0
    %616 = vmatprep.subr.bf16.mxu0 0
    %617 = vmatpush1.bf16.msra.mxu0 0
    %618 = vmatprep.subr.bf16.mxu0 0
    %619 = vmatpush1.bf16.msra.mxu0 0
    %620 = vmatprep.subr.bf16.mxu0 0
    %621 = vmatpush1.bf16.msra.mxu0 0
    %622 = vmatprep.subr.bf16.mxu0 0
    %623 = vmatpush1.bf16.msra.mxu0 %v603
    %624 = vmatprep.subr.bf16.mxu0 0
    %625 = vmatpush2.bf16.msra.mxu0 0
    %626 = vmatprep.subr.bf16.mxu0 0
    %627 = vmatpush2.bf16.msra.mxu0 0
    %628 = vmatprep.subr.bf16.mxu0 0
    %629 = vmatpush2.bf16.msra.mxu0 0
    %630 = vmatprep.subr.bf16.mxu0 0
    %631 = vmatpush2.bf16.msra.mxu0 0
    %632 = vmatprep.subr.bf16.mxu0 0
    %633 = vmatpush2.bf16.msra.mxu0 0
    %634 = vmatprep.subr.bf16.mxu0 0
    %635 = vmatpush2.bf16.msra.mxu0 0
    %636 = vmatprep.subr.bf16.mxu0 0
    %637 = vmatpush2.bf16.msra.mxu0 0
    %638 = vmatprep.subr.bf16.mxu0 0
    %639 = vmatpush2.bf16.msra.mxu0 0
    %640 = vmatprep.mubr.bf16.mxu0 0
    %641 = vmatmul.mubr.bf16.gmra.mxu0 %v606
    %v642 = vpop.f32.mrf.mxu0
    %v643 = vadd.f32 0.0, %v642
    %v644 = vpop.f32.mrf.mxu0
    %v645 = vpop.f32.mrf.mxu0
    %v646 = vadd.f32 0.0, %v645
    %v647 = vpop.f32.mrf.mxu0
    %648 = vdwg.mxu0
    %651 = vrot.lane.b32.xlu0 %v393, 8
    %v652 = vpop.permute.xlu0 %651
    %653 = vrot.lane.b32.xlu0 %v396, 8
    %v654 = vpop.permute.xlu0 %653
    %659 = vrot.lane.b32.xlu0 %v518, 16
    %v660 = vpop.permute.xlu0 %659
    %661 = vrot.lane.b32.xlu0 %v521, 16
    %v662 = vpop.permute.xlu0 %661
    %667 = vrot.lane.b32.xlu0 %v643, 24
    %v668 = vpop.permute.xlu0 %667
    %669 = vrot.lane.b32.xlu0 %v646, 24
    %v670 = vpop.permute.xlu0 %669
    %v673 = vsel %vm151, %v268, %v652
    %v674 = vsel %vm151, %v271, %v654
    %v675 = vsel %vm203, %v673, %v660
    %v676 = vsel %vm203, %v674, %v662
    %vm677 = vcmask 195584
    %v678 = vsel %vm677, %v675, %v668
    %v679 = vsel %vm677, %v676, %v670
    %v680 = vpack.c.bf16 %v679, %v678
    %v681 = vld [vmem:[#allocation7] sm:$0xf]
    %v682 = vld [vmem:[#allocation7 + $0x4] sm:$0xf]
    %v683 = vld [vmem:[#allocation7 + $0x8] sm:$0xf]
    %v684 = vld [vmem:[#allocation7 + $0xc] sm:$0xf]
    %v685 = vld [vmem:[%s3] sm:$0x1]
    %v687 = vlaneseq
    %v688 = vshrl.u32 %v687, 7
    %v689 = vsub.s32 0, %v688
    %v690 = vrot.slane %v685, %v689
    %v696 = vunpack.c.l.b16 %v681
    %v697 = vunpack.c.l.b16 %v682
    %v698 = vunpack.c.l.b16 %v683
    %v699 = vunpack.c.l.b16 %v684
    %v700 = vpack.c.b16 %v697, %v696
    %v701 = vpack.c.b16 %v699, %v698
    %v705 = vsel %vm100, %v680, 0
    %707 = vmatprep.subr.bf16.mxu0 0
    %708 = vmatpush1.bf16.msra.mxu0 0
    %709 = vmatprep.subr.bf16.mxu0 0
    %710 = vmatpush1.bf16.msra.mxu0 0
    %711 = vmatprep.subr.bf16.mxu0 0
    %712 = vmatpush1.bf16.msra.mxu0 0
    %713 = vmatprep.subr.bf16.mxu0 0
    %714 = vmatpush1.bf16.msra.mxu0 0
    %715 = vmatprep.subr.bf16.mxu0 0
    %716 = vmatpush1.bf16.msra.mxu0 0
    %717 = vmatprep.subr.bf16.mxu0 0
    %718 = vmatpush1.bf16.msra.mxu0 0
    %719 = vmatprep.subr.bf16.mxu0 0
    %720 = vmatpush1.bf16.msra.mxu0 %v701
    %721 = vmatprep.subr.bf16.mxu0 0
    %722 = vmatpush1.bf16.msra.mxu0 %v700
    %723 = vmatprep.subr.bf16.mxu0 0
    %724 = vmatpush2.bf16.msra.mxu0 0
    %725 = vmatprep.subr.bf16.mxu0 0
    %726 = vmatpush2.bf16.msra.mxu0 0
    %727 = vmatprep.subr.bf16.mxu0 0
    %728 = vmatpush2.bf16.msra.mxu0 0
    %729 = vmatprep.subr.bf16.mxu0 0
    %730 = vmatpush2.bf16.msra.mxu0 0
    %731 = vmatprep.subr.bf16.mxu0 0
    %732 = vmatpush2.bf16.msra.mxu0 0
    %733 = vmatprep.subr.bf16.mxu0 0
    %734 = vmatpush2.bf16.msra.mxu0 0
    %735 = vmatprep.subr.bf16.mxu0 0
    %736 = vmatpush2.bf16.msra.mxu0 0
    %737 = vmatprep.subr.bf16.mxu0 0
    %738 = vmatpush2.bf16.msra.mxu0 0
    %739 = vmatprep.mubr.bf16.mxu0 0
    %740 = vmatmul.mubr.bf16.gmra.mxu0 %v705
    %v741 = vpop.f32.mrf.mxu0
    %v742 = vadd.f32 %v690, %v741
    %v743 = vpop.f32.mrf.mxu0
    %v744 = vpop.f32.mrf.mxu0
    %v745 = vadd.f32 %v690, %v744
    %v746 = vpop.f32.mrf.mxu0
    %747 = vdwg.mxu0
    %748 = vst.msk [vmem:[#allocation10] sm:$0xff] %vm100, %v742
    %749 = vst.msk [vmem:[#allocation10 + $0x8] sm:$0xff] %vm100, %v745
    // Predicated region
    $region38: #{tpu_custom_call.1} parent=1 // pred_check
      _
    $region39: #{tpu_custom_call.1} parent=1 // pred_check_branch
      %751 = sbr.rel (0) target = $region41
    $region40: #{tpu_custom_call.1} parent=1 // pred_region
      %s753 = ssub.s32 256, 256
      %754 = vsyncadd [#allocation4], %s753
      %s755 = sshll.u32 [#allocation10], 4
      %s756 = int_to_ptr.vmem [resolvable:$true] %s755
      %761 = dma.vmem_to_hbm [thread:$0]  %s756, 256, %s5, [#allocation4], 128, 128, 8
    $region41: #{tpu_custom_call.1} parent=1 // pred_fallthru
      _
    // Predicated region
    $region42: #{tpu_custom_call.1} parent=1 // pred_check
      _
    $region43: #{tpu_custom_call.1} parent=1 // pred_check_branch
      %763 = sbr.rel (0) target = $region45
    $region44: #{tpu_custom_call.1} parent=1 // pred_region
      %764 = dma.done [#allocation4], 256
    $region45: #{tpu_custom_call.1} parent=1 // pred_fallthru
      _
    %765 = vsyncpa [#allocation3], 1
    %766 = vsyncpa [#allocation6], 1
    %767 = vsyncpa [#allocation9], 1
    %768 = vsyncpa [#allocation4], 1

</llo_original>
